<compile_context>
chip_gen: v7x
topology: tpu7x:2x2x1
jax: 0.10.0
libtpu: 0.0.40
codegen_flags: <defaults>
</compile_context>

<pallas_src>
import functools

import numpy as np

import jax
import jax.numpy as jnp
from jax.experimental import pallas as pl
from jax.experimental.pallas import tpu as pltpu


def _round_up(x, m):
    return (x + m - 1) // m * m


def _comp_layer_kernel(starts_ref, counts_ref,          # scalar prefetch (SMEM)
                       comp_ref, score_ref, dst_ref, w_ref,
                       out_ref,
                       node_max, node_sum, acc):
    # Grid: (node_tile n ["parallel"], edge_step k ["arbitrary"])
    n = pl.program_id(0)
    k = pl.program_id(1)
    last_k = pl.num_programs(1) - 1

    tn = acc.shape[0]
    te = dst_ref.shape[1]
    neg_big = jnp.float32(-1e30)

    # Reset the online-softmax state at the start of each node tile.
    @pl.when(k == 0)
    def _():
        node_max[...] = jnp.full_like(node_max, neg_big)
        node_sum[...] = jnp.zeros_like(node_sum)
        acc[...] = jnp.zeros_like(acc)

    # Only real edge blocks of this node tile do work; clamped repeats skip.
    @pl.when(k < counts_ref[n])
    def _():
        # Per-tile incidence mask rebuilt in VMEM from int32 dst indices.
        row_ids = n * tn + jax.lax.broadcasted_iota(jnp.int32, (tn, te), 0)
        mask = row_ids == dst_ref[...]                                # [TN,TE]

        score = score_ref[...]                                        # [1, TE]
        masked_score = jnp.where(mask, score, neg_big)                # [TN,TE]
        tile_max = jnp.max(masked_score, axis=-1, keepdims=True)      # [TN, 1]
        new_max = jnp.maximum(node_max[...], tile_max)                # [TN, 1]

        # Online-softmax rescale of the running accumulators (TN exps).
        rescale = jnp.exp(node_max[...] - new_max)                    # [TN, 1]

        # Gather each edge's running dst max (sublane max over masked rows),
        # then exp at per-edge granularity only (TE exps, not TN*TE).
        edge_max = jnp.max(jnp.where(mask, new_max, neg_big),
                           axis=0, keepdims=True)                     # [1, TE]
        p_edge = jnp.exp(jnp.minimum(score - edge_max, 0.0))          # [1, TE]
        p = jnp.where(mask, p_edge, 0.0)                              # [TN,TE]

        node_sum[...] = rescale * node_sum[...] + jnp.sum(
            p, axis=-1, keepdims=True)
        acc[...] = rescale * acc[...] + jnp.dot(
            p.astype(jnp.bfloat16), comp_ref[...],
            preferred_element_type=jnp.float32)
        node_max[...] = new_max

    # Finalize: normalize, project, tanh (isolated/padded nodes -> 0).
    @pl.when(k == last_k)
    def _():
        denom = node_sum[...]
        inv = pl.reciprocal(jnp.where(denom > 0, denom, 1.0), approx=True)
        neigh = jnp.where(denom > 0, acc[...] * inv, 0.0)             # [TN, D]
        out_ref[...] = jnp.tanh(
            jnp.dot(neigh, w_ref[...], preferred_element_type=jnp.float32))


@functools.partial(
    jax.jit,
    static_argnames=("num_nodes", "d", "tn", "te", "d_pad", "n_pad", "e_pad",
                     "k_steps"))
def _launch(ent_emb, rel_emb, node_id, src_s, dst_s, rel_s, neigh_w,
            starts, counts, *, num_nodes, d, tn, te, d_pad, n_pad, e_pad,
            k_steps):
    num_edges = src_s.shape[0]
    n_tiles = n_pad // tn

    # Row gathers + composition stay in XLA; the kernel streams only
    # comp (bf16), score (f32) and dst indices (i32) — O(E*D) total.
    h = ent_emb[node_id].astype(jnp.float32)                          # [N, D]
    comp = h[src_s] * rel_emb[rel_s].astype(jnp.float32)              # [E, D]
    score = jnp.sum(comp * h[dst_s], axis=-1)                         # [E]

    comp_p = jnp.pad(comp, ((0, e_pad - num_edges),
                            (0, d_pad - d))).astype(jnp.bfloat16)     # bf16
    score_p = jnp.pad(score, (0, e_pad - num_edges))[None, :]         # [1,E_p]
    # Padded edges get dst = n_pad, which never matches a row id -> ignored.
    dst_p = jnp.full((1, e_pad), n_pad, dtype=jnp.int32)
    dst_p = dst_p.at[0, :num_edges].set(dst_s.astype(jnp.int32))
    w_p = jnp.pad(neigh_w.astype(jnp.float32),
                  ((0, d_pad - d), (0, d_pad - d)))

    def edge_map(n, k, starts_ref, counts_ref):
        c = counts_ref[n]
        blk = starts_ref[n] + jnp.minimum(k, jnp.maximum(c - 1, 0))
        return (blk, 0)

    def edge_row_map(n, k, starts_ref, counts_ref):
        c = counts_ref[n]
        blk = starts_ref[n] + jnp.minimum(k, jnp.maximum(c - 1, 0))
        return (0, blk)

    flops = (2 * n_tiles * k_steps * tn * te * d_pad      # P @ comp
             + 2 * n_pad * d_pad * d_pad)                 # neigh @ W
    transcendentals = n_tiles * k_steps * (tn + te) + n_pad * d_pad
    bytes_accessed = (e_pad * d_pad * 2 + e_pad * 8
                      + n_pad * d_pad * 4 + d_pad * d_pad * 4
                      + 8 * n_tiles)

    out = pl.pallas_call(
        _comp_layer_kernel,
        out_shape=jax.ShapeDtypeStruct((n_pad, d_pad), jnp.float32),
        grid_spec=pltpu.PrefetchScalarGridSpec(
            num_scalar_prefetch=2,
            grid=(n_tiles, k_steps),
            in_specs=[
                pl.BlockSpec((te, d_pad), edge_map),                  # comp
                pl.BlockSpec((1, te), edge_row_map),                  # score
                pl.BlockSpec((1, te), edge_row_map),                  # dst ids
                pl.BlockSpec((d_pad, d_pad), lambda n, k, s, c: (0, 0)),  # W
            ],
            out_specs=pl.BlockSpec((tn, d_pad), lambda n, k, s, c: (n, 0)),
            scratch_shapes=[
                pltpu.VMEM((tn, 1), jnp.float32),       # running node max
                pltpu.VMEM((tn, 1), jnp.float32),       # softmax denominator
                pltpu.VMEM((tn, d_pad), jnp.float32),   # weighted message acc
            ],
        ),
        compiler_params=pltpu.CompilerParams(
            dimension_semantics=("parallel", "arbitrary"),
            vmem_limit_bytes=32 * 1024 * 1024,
        ),
        cost_estimate=pl.CostEstimate(
            flops=flops,
            transcendentals=transcendentals,
            bytes_accessed=bytes_accessed),
    )(starts, counts, comp_p, score_p, dst_p, w_p)

    return out[:num_nodes, :d]


def comp_layer_forward(ent_emb, rel_emb, node_id, src, dst, rel_id, neigh_w,
                       *, num_nodes):
    """Pallas implementation of CompLayer.forward (comp_op='mul', bn=None)."""
    d = ent_emb.shape[1]
    num_edges = src.shape[0]

    # Tile / pad sizes aligned to the (8, 128) vreg tile; TN capped at 512 so
    # graphs > 512 nodes keep >= 2 parallel node tiles (v7x megacore).
    d_pad = _round_up(d, 128)
    tn = min(512, _round_up(num_nodes, 8))
    n_pad = _round_up(num_nodes, tn)
    n_tiles = n_pad // tn
    te = min(512, _round_up(max(num_edges, 1), 128))
    e_pad = _round_up(max(num_edges, 1), te)

    # -- host-side (concrete) preprocessing: sort edges by destination so each
    #    node tile owns a contiguous edge-block range, scalar-prefetched below.
    dst_np = np.asarray(dst)
    order = np.argsort(dst_np, kind="stable")
    dst_sorted_np = dst_np[order]
    src_s = jnp.asarray(np.asarray(src)[order])
    dst_s = jnp.asarray(dst_sorted_np)
    rel_s = jnp.asarray(np.asarray(rel_id)[order])

    starts = np.zeros((n_tiles,), np.int32)
    counts = np.zeros((n_tiles,), np.int32)
    for n in range(n_tiles):
        lo = np.searchsorted(dst_sorted_np, n * tn, side="left")
        hi = np.searchsorted(dst_sorted_np, (n + 1) * tn, side="left")
        if hi > lo:
            sb = lo // te
            eb = (hi - 1) // te + 1
            starts[n] = sb
            counts[n] = eb - sb
    k_steps = int(max(1, counts.max()))

    return _launch(ent_emb, rel_emb, node_id, src_s, dst_s, rel_s, neigh_w,
                   jnp.asarray(starts), jnp.asarray(counts),
                   num_nodes=num_nodes, d=d, tn=tn, te=te, d_pad=d_pad,
                   n_pad=n_pad, e_pad=e_pad, k_steps=k_steps)


def _reference_forward(ent_emb, rel_emb, node_id, src, dst, rel_id, neigh_w,
                       *, num_nodes):
    """Pure-JAX reference of the DGL message-passing semantics."""
    h = ent_emb[node_id]
    comp = h[src] * rel_emb[rel_id]
    norm = jnp.sum(comp * h[dst], axis=-1)
    mx = jax.ops.segment_max(norm, dst, num_segments=num_nodes)
    p = jnp.exp(norm - mx[dst])
    denom = jax.ops.segment_sum(p, dst, num_segments=num_nodes)
    alpha = p / denom[dst]
    neigh = jax.ops.segment_sum(comp * alpha[:, None], dst,
                                num_segments=num_nodes)
    return jnp.tanh(neigh @ neigh_w)


if __name__ == "__main__":
    key = jax.random.PRNGKey(0)
    k_ent, k_rel, k_w, k_nid, k_src, k_dst, k_rid = jax.random.split(key, 7)

    h_dim = 32
    num_ent = 8          # graph has num_ent nodes
    num_rel = 4          # rel_emb holds 2 * num_rel relations
    num_edges = 16

    # deterministic "parameters" / embeddings (xavier_normal-style init)
    ent_emb = jax.random.normal(k_ent, (num_ent, h_dim), jnp.float32)
    rel_emb = jax.random.normal(k_rel, (2 * num_rel, h_dim), jnp.float32)
    xavier_std = (2.0 / (h_dim + h_dim)) ** 0.5
    neigh_w = xavier_std * jax.random.normal(k_w, (h_dim, h_dim), jnp.float32)

    # synthetic graph structure (kg.ndata['id'], edges, kg.edata['type'])
    node_id = jax.random.permutation(k_nid, num_ent)
    src = jax.random.randint(k_src, (num_edges,), 0, num_ent)
    dst = jax.random.randint(k_dst, (num_edges,), 0, num_ent)
    rel_id = jax.random.randint(k_rid, (num_edges,), 0, 2 * num_rel)

    out = comp_layer_forward(ent_emb, rel_emb, node_id, src, dst, rel_id,
                             neigh_w, num_nodes=num_ent)
    out = jax.block_until_ready(out)

    ref = _reference_forward(ent_emb, rel_emb, node_id, src, dst, rel_id,
                             neigh_w, num_nodes=num_ent)
    assert out.shape == (num_ent, h_dim)
    # Tolerance loosened vs v2 because comp / P are streamed & matmul'd in
    # bf16 (accumulators stay f32) and the normalize uses approx reciprocal.
    err = float(jnp.max(jnp.abs(out - ref)))
    assert err < 3e-2, f"mismatch vs reference: max abs err = {err}"
    print("KERNEL_OK")
</pallas_src>

<mosaic_0001>
module attributes {stable_mosaic.version = 11 : i64} {
  func.func @_comp_layer_kernel(%arg0: i32, %arg1: i32, %arg2: memref<1xi32, #tpu.memory_space<smem>>, %arg3: memref<1xi32, #tpu.memory_space<smem>>, %arg4: memref<128x128xbf16, #tpu.memory_space<vmem>>, %arg5: memref<1x128xf32, #tpu.memory_space<vmem>>, %arg6: memref<1x128xi32, #tpu.memory_space<vmem>>, %arg7: memref<128x128xf32, #tpu.memory_space<vmem>>, %arg8: memref<8x128xf32, #tpu.memory_space<vmem>>, %arg9: memref<8x1xf32, #tpu.memory_space<vmem>>, %arg10: memref<8x1xf32, #tpu.memory_space<vmem>>, %arg11: memref<8x128xf32, #tpu.memory_space<vmem>>) attributes {dimension_semantics = [#tpu.dimension_semantics<parallel>, #tpu.dimension_semantics<arbitrary>], iteration_bounds = array<i64: 1, 1>, scalar_prefetch = 2 : i64, scratch_operands = 3 : i64, tpu.core_type = #tpu.core_type<tc>, window_params = [{transform_indices = @transform_0, window_bounds = array<i64: 128, 128>}, {transform_indices = @transform_1, window_bounds = array<i64: 1, 128>}, {transform_indices = @transform_2, window_bounds = array<i64: 1, 128>}, {pipeline_mode = #tpu.pipeline_mode<synchronous>, transform_indices = @transform_3, window_bounds = array<i64: 128, 128>}, {transform_indices = @transform_4, window_bounds = array<i64: 8, 128>}]} {
    %c0_i32 = arith.constant 0 : i32
    %0 = arith.cmpi eq, %arg1, %c0_i32 : i32
    %1 = arith.extui %0 : i1 to i32
    %cst = arith.constant -1.000000e+30 : f32
    %c0_i32_0 = arith.constant 0 : i32
    %2 = arith.cmpi ne, %1, %c0_i32_0 : i32
    scf.if %2 {
      %11 = vector.broadcast %cst : f32 to vector<8x1xf32>
      %c0 = arith.constant 0 : index
      %c0_5 = arith.constant 0 : index
      %12 = vector.load %arg9[%c0, %c0_5] : memref<8x1xf32, #tpu.memory_space<vmem>>, vector<8x1xf32>
      tpu.vector_store %arg9[%c0, %c0_5], %11 {strides = array<i32>} : memref<8x1xf32, #tpu.memory_space<vmem>>, vector<8x1xf32>,
      %cst_6 = arith.constant 0.000000e+00 : f32
      %13 = vector.broadcast %cst_6 : f32 to vector<8x1xf32>
      %c0_7 = arith.constant 0 : index
      %c0_8 = arith.constant 0 : index
      %14 = vector.load %arg10[%c0_7, %c0_8] : memref<8x1xf32, #tpu.memory_space<vmem>>, vector<8x1xf32>
      tpu.vector_store %arg10[%c0_7, %c0_8], %13 {strides = array<i32>} : memref<8x1xf32, #tpu.memory_space<vmem>>, vector<8x1xf32>,
      %cst_9 = arith.constant 0.000000e+00 : f32
      %15 = vector.broadcast %cst_9 : f32 to vector<8x128xf32>
      %c0_10 = arith.constant 0 : index
      %c0_11 = arith.constant 0 : index
      %16 = vector.load %arg11[%c0_10, %c0_11] : memref<8x128xf32, #tpu.memory_space<vmem>>, vector<8x128xf32>
      tpu.vector_store %arg11[%c0_10, %c0_11], %15 {strides = array<i32>} : memref<8x128xf32, #tpu.memory_space<vmem>>, vector<8x128xf32>,
    } else {
    }
    %3 = arith.index_cast %arg0 : i32 to index
    %4 = memref.load %arg3[%3] : memref<1xi32, #tpu.memory_space<smem>>
    %5 = arith.cmpi slt, %arg1, %4 : i32
    %6 = arith.extui %5 : i1 to i32
    %cst_1 = arith.constant -1.000000e+30 : f32
    %c0_i32_2 = arith.constant 0 : i32
    %7 = arith.cmpi ne, %6, %c0_i32_2 : i32
    scf.if %7 {
      %c8_i32 = arith.constant 8 : i32
      %11 = arith.muli %arg0, %c8_i32 : i32
      %12 = tpu.iota {dimensions = array<i32: 0>} : vector<8x128xi32>
      %13 = vector.broadcast %11 : i32 to vector<8x128xi32>
      %14 = arith.addi %13, %12 : vector<8x128xi32>
      %c0 = arith.constant 0 : index
      %c0_5 = arith.constant 0 : index
      %15 = vector.load %arg6[%c0, %c0_5] : memref<1x128xi32, #tpu.memory_space<vmem>>, vector<1x128xi32>
      %16 = vector.broadcast %15 : vector<1x128xi32> to vector<8x128xi32>
      %17 = arith.cmpi eq, %14, %16 : vector<8x128xi32>
      %c0_6 = arith.constant 0 : index
      %c0_7 = arith.constant 0 : index
      %18 = vector.load %arg5[%c0_6, %c0_7] : memref<1x128xf32, #tpu.memory_space<vmem>>, vector<1x128xf32>
      %19 = vector.shape_cast %18 : vector<1x128xf32> to vector<1x128xf32>
      %20 = vector.broadcast %19 : vector<1x128xf32> to vector<8x128xf32>
      %21 = vector.broadcast %cst_1 : f32 to vector<8x128xf32>
      %22 = arith.select %17, %20, %21 : vector<8x128xi1>, vector<8x128xf32>
      %cst_8 = arith.constant dense<0xFF800000> : vector<8xf32>
      %23 = vector.multi_reduction <maximumf>, %22, %cst_8 [1] : vector<8x128xf32> to vector<8xf32>
      %24 = vector.shape_cast %23 : vector<8xf32> to vector<8x1xf32>
      %c0_9 = arith.constant 0 : index
      %c0_10 = arith.constant 0 : index
      %25 = vector.load %arg9[%c0_9, %c0_10] : memref<8x1xf32, #tpu.memory_space<vmem>>, vector<8x1xf32>
      %26 = arith.maximumf %25, %24 : vector<8x1xf32>
      %c0_11 = arith.constant 0 : index
      %c0_12 = arith.constant 0 : index
      %27 = vector.load %arg9[%c0_11, %c0_12] : memref<8x1xf32, #tpu.memory_space<vmem>>, vector<8x1xf32>
      %28 = arith.subf %27, %26 : vector<8x1xf32>
      %29 = math.exp %28 : vector<8x1xf32>
      %30 = vector.shape_cast %26 : vector<8x1xf32> to vector<8x1xf32>
      %31 = vector.broadcast %30 : vector<8x1xf32> to vector<8x128xf32>
      %32 = vector.broadcast %cst_1 : f32 to vector<8x128xf32>
      %33 = arith.select %17, %31, %32 : vector<8x128xi1>, vector<8x128xf32>
      %cst_13 = arith.constant dense<0xFF800000> : vector<128xf32>
      %34 = vector.multi_reduction <maximumf>, %33, %cst_13 [0] : vector<8x128xf32> to vector<128xf32>
      %35 = vector.shape_cast %34 : vector<128xf32> to vector<1x128xf32>
      %36 = arith.subf %18, %35 : vector<1x128xf32>
      %cst_14 = arith.constant 0.000000e+00 : f32
      %37 = vector.broadcast %cst_14 : f32 to vector<1x128xf32>
      %38 = arith.minimumf %36, %37 : vector<1x128xf32>
      %39 = math.exp %38 : vector<1x128xf32>
      %cst_15 = arith.constant 0.000000e+00 : f32
      %40 = vector.shape_cast %39 : vector<1x128xf32> to vector<1x128xf32>
      %41 = vector.broadcast %40 : vector<1x128xf32> to vector<8x128xf32>
      %42 = vector.broadcast %cst_15 : f32 to vector<8x128xf32>
      %43 = arith.select %17, %41, %42 : vector<8x128xi1>, vector<8x128xf32>
      %c0_16 = arith.constant 0 : index
      %c0_17 = arith.constant 0 : index
      %44 = vector.load %arg10[%c0_16, %c0_17] : memref<8x1xf32, #tpu.memory_space<vmem>>, vector<8x1xf32>
      %45 = arith.mulf %29, %44 : vector<8x1xf32>
      %cst_18 = arith.constant dense<0.000000e+00> : vector<8xf32>
      %46 = vector.multi_reduction <add>, %43, %cst_18 [1] : vector<8x128xf32> to vector<8xf32>
      %47 = vector.shape_cast %46 : vector<8xf32> to vector<8x1xf32>
      %48 = arith.addf %45, %47 : vector<8x1xf32>
      %c0_19 = arith.constant 0 : index
      %c0_20 = arith.constant 0 : index
      %49 = vector.load %arg10[%c0_19, %c0_20] : memref<8x1xf32, #tpu.memory_space<vmem>>, vector<8x1xf32>
      tpu.vector_store %arg10[%c0_19, %c0_20], %48 {strides = array<i32>} : memref<8x1xf32, #tpu.memory_space<vmem>>, vector<8x1xf32>,
      %c0_21 = arith.constant 0 : index
      %c0_22 = arith.constant 0 : index
      %50 = vector.load %arg11[%c0_21, %c0_22] : memref<8x128xf32, #tpu.memory_space<vmem>>, vector<8x128xf32>
      %51 = vector.broadcast %29 : vector<8x1xf32> to vector<8x128xf32>
      %52 = arith.mulf %51, %50 : vector<8x128xf32>
      %53 = arith.truncf %43 : vector<8x128xf32> to vector<8x128xbf16>
      %c0_23 = arith.constant 0 : index
      %c0_24 = arith.constant 0 : index
      %54 = vector.load %arg4[%c0_23, %c0_24] : memref<128x128xbf16, #tpu.memory_space<vmem>>, vector<128x128xbf16>
      %cst_25 = arith.constant dense<0.000000e+00> : vector<8x128xf32>
      %55 = tpu.matmul %53, %54, %cst_25 {dimension_numbers = #tpu.dot_dimension_numbers<[1], [0], [0], [1], [0, 0, 1, 1], [], []>} : vector<8x128xbf16>, vector<128x128xbf16>, vector<8x128xf32> -> vector<8x128xf32>
      %56 = arith.addf %52, %55 : vector<8x128xf32>
      %c0_26 = arith.constant 0 : index
      %c0_27 = arith.constant 0 : index
      %57 = vector.load %arg11[%c0_26, %c0_27] : memref<8x128xf32, #tpu.memory_space<vmem>>, vector<8x128xf32>
      tpu.vector_store %arg11[%c0_26, %c0_27], %56 {strides = array<i32>} : memref<8x128xf32, #tpu.memory_space<vmem>>, vector<8x128xf32>,
      %c0_28 = arith.constant 0 : index
      %c0_29 = arith.constant 0 : index
      %58 = vector.load %arg9[%c0_28, %c0_29] : memref<8x1xf32, #tpu.memory_space<vmem>>, vector<8x1xf32>
      tpu.vector_store %arg9[%c0_28, %c0_29], %26 {strides = array<i32>} : memref<8x1xf32, #tpu.memory_space<vmem>>, vector<8x1xf32>,
    } else {
    }
    %c0_i32_3 = arith.constant 0 : i32
    %8 = arith.cmpi eq, %arg1, %c0_i32_3 : i32
    %9 = arith.extui %8 : i1 to i32
    %c0_i32_4 = arith.constant 0 : i32
    %10 = arith.cmpi ne, %9, %c0_i32_4 : i32
    scf.if %10 {
      %c0 = arith.constant 0 : index
      %c0_5 = arith.constant 0 : index
      %11 = vector.load %arg10[%c0, %c0_5] : memref<8x1xf32, #tpu.memory_space<vmem>>, vector<8x1xf32>
      %cst_6 = arith.constant 0.000000e+00 : f32
      %12 = vector.broadcast %cst_6 : f32 to vector<8x1xf32>
      %13 = arith.cmpf ogt, %11, %12 : vector<8x1xf32>
      %cst_7 = arith.constant 1.000000e+00 : f32
      %14 = vector.broadcast %cst_7 : f32 to vector<8x1xf32>
      %15 = arith.select %13, %11, %14 : vector<8x1xi1>, vector<8x1xf32>
      %16 = tpu.reciprocal %15 {approx = true} : vector<8x1xf32> -> vector<8x1xf32>
      %cst_8 = arith.constant 0.000000e+00 : f32
      %17 = vector.broadcast %cst_8 : f32 to vector<8x1xf32>
      %18 = arith.cmpf ogt, %11, %17 : vector<8x1xf32>
      %c0_9 = arith.constant 0 : index
      %c0_10 = arith.constant 0 : index
      %19 = vector.load %arg11[%c0_9, %c0_10] : memref<8x128xf32, #tpu.memory_space<vmem>>, vector<8x128xf32>
      %20 = vector.broadcast %16 : vector<8x1xf32> to vector<8x128xf32>
      %21 = arith.mulf %19, %20 : vector<8x128xf32>
      %cst_11 = arith.constant 0.000000e+00 : f32
      %22 = vector.shape_cast %18 : vector<8x1xi1> to vector<8x1xi1>
      %23 = vector.broadcast %22 : vector<8x1xi1> to vector<8x128xi1>
      %24 = vector.broadcast %cst_11 : f32 to vector<8x128xf32>
      %25 = arith.select %23, %21, %24 : vector<8x128xi1>, vector<8x128xf32>
      %c0_12 = arith.constant 0 : index
      %c0_13 = arith.constant 0 : index
      %26 = vector.load %arg7[%c0_12, %c0_13] : memref<128x128xf32, #tpu.memory_space<vmem>>, vector<128x128xf32>
      %cst_14 = arith.constant dense<0.000000e+00> : vector<8x128xf32>
      %27 = tpu.matmul %25, %26, %cst_14 {dimension_numbers = #tpu.dot_dimension_numbers<[1], [0], [0], [1], [0, 0, 1, 1], [], []>} : vector<8x128xf32>, vector<128x128xf32>, vector<8x128xf32> -> vector<8x128xf32>
      %28 = math.tanh %27 : vector<8x128xf32>
      %c0_15 = arith.constant 0 : index
      %c0_16 = arith.constant 0 : index
      %29 = vector.load %arg8[%c0_15, %c0_16] : memref<8x128xf32, #tpu.memory_space<vmem>>, vector<8x128xf32>
      tpu.vector_store %arg8[%c0_15, %c0_16], %28 {strides = array<i32>} : memref<8x128xf32, #tpu.memory_space<vmem>>, vector<8x128xf32>,
    } else {
    }
    return
  }
  func.func @transform_0(%arg0: i32, %arg1: i32, %arg2: memref<1xi32, #tpu.memory_space<smem>>, %arg3: memref<1xi32, #tpu.memory_space<smem>>) -> (i32, i32) {
    %0 = arith.index_cast %arg0 : i32 to index
    %1 = memref.load %arg3[%0] : memref<1xi32, #tpu.memory_space<smem>>
    %2 = arith.index_cast %arg0 : i32 to index
    %3 = memref.load %arg2[%2] : memref<1xi32, #tpu.memory_space<smem>>
    %c1_i32 = arith.constant 1 : i32
    %4 = arith.subi %1, %c1_i32 : i32
    %c0_i32 = arith.constant 0 : i32
    %5 = arith.maxsi %4, %c0_i32 : i32
    %6 = arith.minsi %arg1, %5 : i32
    %7 = arith.addi %3, %6 : i32
    %c0_i32_0 = arith.constant 0 : i32
    %c0_i32_1 = arith.constant 0 : i32
    return %7, %c0_i32_0 : i32, i32
  }
  func.func @transform_1(%arg0: i32, %arg1: i32, %arg2: memref<1xi32, #tpu.memory_space<smem>>, %arg3: memref<1xi32, #tpu.memory_space<smem>>) -> (i32, i32) {
    %0 = arith.index_cast %arg0 : i32 to index
    %1 = memref.load %arg3[%0] : memref<1xi32, #tpu.memory_space<smem>>
    %2 = arith.index_cast %arg0 : i32 to index
    %3 = memref.load %arg2[%2] : memref<1xi32, #tpu.memory_space<smem>>
    %c1_i32 = arith.constant 1 : i32
    %4 = arith.subi %1, %c1_i32 : i32
    %c0_i32 = arith.constant 0 : i32
    %5 = arith.maxsi %4, %c0_i32 : i32
    %6 = arith.minsi %arg1, %5 : i32
    %7 = arith.addi %3, %6 : i32
    %c0_i32_0 = arith.constant 0 : i32
    %c0_i32_1 = arith.constant 0 : i32
    return %c0_i32_0, %7 : i32, i32
  }
  func.func @transform_2(%arg0: i32, %arg1: i32, %arg2: memref<1xi32, #tpu.memory_space<smem>>, %arg3: memref<1xi32, #tpu.memory_space<smem>>) -> (i32, i32) {
    %0 = arith.index_cast %arg0 : i32 to index
    %1 = memref.load %arg3[%0] : memref<1xi32, #tpu.memory_space<smem>>
    %2 = arith.index_cast %arg0 : i32 to index
    %3 = memref.load %arg2[%2] : memref<1xi32, #tpu.memory_space<smem>>
    %c1_i32 = arith.constant 1 : i32
    %4 = arith.subi %1, %c1_i32 : i32
    %c0_i32 = arith.constant 0 : i32
    %5 = arith.maxsi %4, %c0_i32 : i32
    %6 = arith.minsi %arg1, %5 : i32
    %7 = arith.addi %3, %6 : i32
    %c0_i32_0 = arith.constant 0 : i32
    %c0_i32_1 = arith.constant 0 : i32
    return %c0_i32_0, %7 : i32, i32
  }
  func.func @transform_3(%arg0: i32, %arg1: i32, %arg2: memref<1xi32, #tpu.memory_space<smem>>, %arg3: memref<1xi32, #tpu.memory_space<smem>>) -> (i32, i32) {
    %c0_i32 = arith.constant 0 : i32
    %c0_i32_0 = arith.constant 0 : i32
    %c0_i32_1 = arith.constant 0 : i32
    return %c0_i32, %c0_i32_0 : i32, i32
  }
  func.func @transform_4(%arg0: i32, %arg1: i32, %arg2: memref<1xi32, #tpu.memory_space<smem>>, %arg3: memref<1xi32, #tpu.memory_space<smem>>) -> (i32, i32) {
    %c0_i32 = arith.constant 0 : i32
    %c0_i32_0 = arith.constant 0 : i32
    return %arg0, %c0_i32 : i32, i32
  }
}

</mosaic_0001>

<llo_original>
// kernel: _launch.1
$region0: #{_launch.1}
  #allocation0 [shape = 'u32[]', space=smem, size = 0x4, offset = 0x4, fixed_abs, tag = 'smem constant byte address 0x4 - core index']
  #allocation1 [shape = 'u32[144,128]{1,0:T(1,128)}', space=vmem, size = 0x12000, scoped, tag = 'internal scratch']
  #allocation2 [shape = 'f32[8,1]{1,0:T(8,128)}', space=vmem, size = 0x1000, scoped, tag = 'scratch operand']
  #allocation3 [shape = 'f32[8,1]{1,0:T(8,128)}', space=vmem, size = 0x1000, scoped, tag = 'scratch operand']
  #allocation4 [shape = 'f32[8,128]{1,0:T(8,128)}', space=vmem, size = 0x1000, scoped, tag = 'scratch operand']
  #allocation5 [shape = 's32[1]{0}', space=sflag, size = 0x4, scoped, tag = 'scoped memory for _launch.1']
  #allocation6 [shape = 's32[1]{0:T(128)S(6)}', space=smem, size = 0x200, scoped, tag = 'prefetched SMEM operand 0']
  #allocation7 [shape = 's32[1]{0:T(128)S(6)}', space=smem, size = 0x200, scoped, tag = 'prefetched SMEM operand 1']
  %s0 = inlined_call_operand.<no memory space> [shape: s32[1], index: 0, kind: input, shape index: {}]
  %s1 = inlined_call_operand.<no memory space> [shape: s32[1], index: 1, kind: input, shape index: {}]
  %s2 = inlined_call_operand.vmem [shape: bf16[128,128], index: 2, kind: input, shape index: {}]
  %s3 = inlined_call_operand.vmem [shape: f32[1,128], index: 3, kind: input, shape index: {}]
  %s4 = inlined_call_operand.vmem [shape: s32[1,128], index: 4, kind: input, shape index: {}]
  %s5 = inlined_call_operand.vmem [shape: f32[128,128], index: 5, kind: input, shape index: {}]
  %s6 = inlined_call_operand.hbm [shape: f32[8,128], index: 6, kind: output, shape index: {}]
  %s7 = sld [smem:[#allocation0]]
  $region38: #{_launch.1} parent=0
    _
  %s9 = ssub.s32 1, %s7
  %s10 = scalar_select 0, %s9, %s7
  %11 = sst [smem:[#allocation6]] %s0
  %12 = sst [smem:[#allocation7]] %s1
  $region1: #{_launch.1} parent=0
    #allocation8 [shape = 'u8[4096]{0}', space=vmem, size = 0x1000, scoped, tag = 'output window, operand 0, single buffered']
    #allocation9 [shape = 's32[1]{0}', space=sflag, size = 0x4, scoped, tag = 'scoped memory for _launch.1']
    %13 = vsyncpa [#allocation9], 0
    // Predicated region
    $region2: #{_launch.1} parent=1 // pred_check
      _
    $region3: #{_launch.1} parent=1 // pred_check_branch
      %15 = sbr.rel (0) target = $region5
    $region4: #{_launch.1} parent=1 // pred_region
      %s16 = sld [smem:[#allocation7]]
      %s17 = sld [smem:[#allocation6]]
      %s18 = ssub.s32 %s16, 1
      %p19 = scmp.gt.s32.totalorder %s18, 0
      %s20 = scalar_select %p19, %s18, 0
      %p21 = scmp.lt.s32.totalorder 0, %s20
      %s22 = scalar_select %p21, 0, %s20
      %s23 = sadd.s32 %s17, %s22
      %s24 = smul.u32 16, %s23
      %p25 = scmp.lt.s32.totalorder %s24, 15
      %s26 = scalar_select %p25, %s24, 15
      %s27 = smul.addr %s26, 4
      %s28 = scalar_lea.vmem %s2, %s27
      %s29 = sld [smem:[#allocation7]]
      %s30 = sld [smem:[#allocation6]]
      %s31 = ssub.s32 %s29, 1
      %p32 = scmp.gt.s32.totalorder %s31, 0
      %s33 = scalar_select %p32, %s31, 0
      %p34 = scmp.lt.s32.totalorder 0, %s33
      %s35 = scalar_select %p34, 0, %s33
      %s36 = sadd.s32 %s30, %s35
      %s37 = smul.u32 16, %s36
    $region5: #{_launch.1} parent=1 // pred_fallthru
      _
    // Predicated region
    $region6: #{_launch.1} parent=1 // pred_check
      _
    $region7: #{_launch.1} parent=1 // pred_check_branch
      %39 = sbr.rel (0) target = $region9
    $region8: #{_launch.1} parent=1 // pred_region
      %s40 = sld [smem:[#allocation7]]
      %s41 = sld [smem:[#allocation6]]
      %s42 = ssub.s32 %s40, 1
      %p43 = scmp.gt.s32.totalorder %s42, 0
      %s44 = scalar_select %p43, %s42, 0
      %p45 = scmp.lt.s32.totalorder 0, %s44
      %s46 = scalar_select %p45, 0, %s44
      %s47 = sadd.s32 %s41, %s46
      %p48 = scmp.lt.s32.totalorder %s47, 0
      %s49 = scalar_select %p48, %s47, 0
      %s50 = scalar_lea.vmem %s3, %s49
      %s51 = sld [smem:[#allocation7]]
      %s52 = sld [smem:[#allocation6]]
      %s53 = ssub.s32 %s51, 1
      %p54 = scmp.gt.s32.totalorder %s53, 0
      %s55 = scalar_select %p54, %s53, 0
      %p56 = scmp.lt.s32.totalorder 0, %s55
      %s57 = scalar_select %p56, 0, %s55
      %s58 = sadd.s32 %s52, %s57
    $region9: #{_launch.1} parent=1 // pred_fallthru
      _
    // Predicated region
    $region10: #{_launch.1} parent=1 // pred_check
      _
    $region11: #{_launch.1} parent=1 // pred_check_branch
      %60 = sbr.rel (0) target = $region13
    $region12: #{_launch.1} parent=1 // pred_region
      %s61 = sld [smem:[#allocation7]]
      %s62 = sld [smem:[#allocation6]]
      %s63 = ssub.s32 %s61, 1
      %p64 = scmp.gt.s32.totalorder %s63, 0
      %s65 = scalar_select %p64, %s63, 0
      %p66 = scmp.lt.s32.totalorder 0, %s65
      %s67 = scalar_select %p66, 0, %s65
      %s68 = sadd.s32 %s62, %s67
      %p69 = scmp.lt.s32.totalorder %s68, 0
      %s70 = scalar_select %p69, %s68, 0
      %s71 = scalar_lea.vmem %s4, %s70
      %s72 = sld [smem:[#allocation7]]
      %s73 = sld [smem:[#allocation6]]
      %s74 = ssub.s32 %s72, 1
      %p75 = scmp.gt.s32.totalorder %s74, 0
      %s76 = scalar_select %p75, %s74, 0
      %p77 = scmp.lt.s32.totalorder 0, %s76
      %s78 = scalar_select %p77, 0, %s76
      %s79 = sadd.s32 %s73, %s78
    $region13: #{_launch.1} parent=1 // pred_fallthru
      _
    // Predicated region
    $region14: #{_launch.1} parent=1 // pred_check
      _
    $region15: #{_launch.1} parent=1 // pred_check_branch
      %81 = sbr.rel (0) target = $region17
    $region16: #{_launch.1} parent=1 // pred_region
      _
    $region17: #{_launch.1} parent=1 // pred_fallthru
      _
    %s82 = sld [smem:[#allocation7]]
    %s83 = sld [smem:[#allocation6]]
    %s84 = ssub.s32 %s82, 1
    %p85 = scmp.gt.s32.totalorder %s84, 0
    %s86 = scalar_select %p85, %s84, 0
    %p87 = scmp.lt.s32.totalorder 0, %s86
    %s88 = scalar_select %p87, 0, %s86
    %s89 = sadd.s32 %s83, %s88
    %s90 = smul.u32 16, %s89
    %p91 = scmp.lt.s32.totalorder %s90, 15
    %s92 = scalar_select %p91, %s90, 15
    %s93 = smul.addr %s92, 4
    %s94 = scalar_lea.vmem %s2, %s93
    %s95 = sld [smem:[#allocation7]]
    %s96 = sld [smem:[#allocation6]]
    %s97 = ssub.s32 %s95, 1
    %p98 = scmp.gt.s32.totalorder %s97, 0
    %s99 = scalar_select %p98, %s97, 0
    %p100 = scmp.lt.s32.totalorder 0, %s99
    %s101 = scalar_select %p100, 0, %s99
    %s102 = sadd.s32 %s96, %s101
    %p103 = scmp.lt.s32.totalorder %s102, 0
    %s104 = scalar_select %p103, %s102, 0
    %s105 = scalar_lea.vmem %s3, %s104
    %s106 = sld [smem:[#allocation7]]
    %s107 = sld [smem:[#allocation6]]
    %s108 = ssub.s32 %s106, 1
    %p109 = scmp.gt.s32.totalorder %s108, 0
    %s110 = scalar_select %p109, %s108, 0
    %p111 = scmp.lt.s32.totalorder 0, %s110
    %s112 = scalar_select %p111, 0, %s110
    %s113 = sadd.s32 %s107, %s112
    %p114 = scmp.lt.s32.totalorder %s113, 0
    %s115 = scalar_select %p114, %s113, 0
    %s116 = scalar_lea.vmem %s4, %s115
    %s117 = sld [smem:[#allocation7]]
    %s118 = sld [smem:[#allocation6]]
    %s119 = ssub.s32 %s117, 1
    %p120 = scmp.gt.s32.totalorder %s119, 0
    %s121 = scalar_select %p120, %s119, 0
    %p122 = scmp.lt.s32.totalorder 0, %s121
    %s123 = scalar_select %p122, 0, %s121
    %s124 = sadd.s32 %s118, %s123
    %s125 = smul.u32 16, %s124
    %p126 = scmp.lt.s32.totalorder %s125, 15
    %s127 = scalar_select %p126, %s125, 15
    %s128 = smul.addr %s127, 4
    %s129 = scalar_lea.vmem %s2, %s128
    %s130 = sld [smem:[#allocation7]]
    %s131 = sld [smem:[#allocation6]]
    %s132 = ssub.s32 %s130, 1
    %p133 = scmp.gt.s32.totalorder %s132, 0
    %s134 = scalar_select %p133, %s132, 0
    %p135 = scmp.lt.s32.totalorder 0, %s134
    %s136 = scalar_select %p135, 0, %s134
    %s137 = sadd.s32 %s131, %s136
    %s138 = smul.u32 16, %s137
    %s139 = sld [smem:[#allocation7]]
    %s140 = sld [smem:[#allocation6]]
    %s141 = ssub.s32 %s139, 1
    %p142 = scmp.gt.s32.totalorder %s141, 0
    %s143 = scalar_select %p142, %s141, 0
    %p144 = scmp.lt.s32.totalorder 0, %s143
    %s145 = scalar_select %p144, 0, %s143
    %s146 = sadd.s32 %s140, %s145
    %p147 = scmp.lt.s32.totalorder %s146, 0
    %s148 = scalar_select %p147, %s146, 0
    %s149 = scalar_lea.vmem %s3, %s148
    %s150 = sld [smem:[#allocation7]]
    %s151 = sld [smem:[#allocation6]]
    %s152 = ssub.s32 %s150, 1
    %p153 = scmp.gt.s32.totalorder %s152, 0
    %s154 = scalar_select %p153, %s152, 0
    %p155 = scmp.lt.s32.totalorder 0, %s154
    %s156 = scalar_select %p155, 0, %s154
    %s157 = sadd.s32 %s151, %s156
    %s158 = sld [smem:[#allocation7]]
    %s159 = sld [smem:[#allocation6]]
    %s160 = ssub.s32 %s158, 1
    %p161 = scmp.gt.s32.totalorder %s160, 0
    %s162 = scalar_select %p161, %s160, 0
    %p163 = scmp.lt.s32.totalorder 0, %s162
    %s164 = scalar_select %p163, 0, %s162
    %s165 = sadd.s32 %s159, %s164
    %p166 = scmp.lt.s32.totalorder %s165, 0
    %s167 = scalar_select %p166, %s165, 0
    %s168 = scalar_lea.vmem %s4, %s167
    %s169 = sld [smem:[#allocation7]]
    %s170 = sld [smem:[#allocation6]]
    %s171 = ssub.s32 %s169, 1
    %p172 = scmp.gt.s32.totalorder %s171, 0
    %s173 = scalar_select %p172, %s171, 0
    %p174 = scmp.lt.s32.totalorder 0, %s173
    %s175 = scalar_select %p174, 0, %s173
    %s176 = sadd.s32 %s170, %s175
    %p178 = scmp.eq.s32.totalorder 0, 0
    // Predicated region
    $region18: #{_launch.1} parent=1 // pred_check
      %p179 = pneg %p178
    $region19: #{_launch.1} parent=1 // pred_check_branch
      %181 = sbr.rel (%p179) target = $region21
    $region20: #{_launch.1} parent=1 // pred_region
      %vm182 = vcmask 7168
      %183 = vst.msk [vmem:[#allocation2] sm:$0xff] %vm182, -1e+30
      %184 = vst.msk [vmem:[#allocation3] sm:$0xff] %vm182, 0.0
      %185 = vst [vmem:[#allocation4] sm:$0xff] 0.0
    $region21: #{_launch.1} parent=1 // pred_fallthru
      _
    %s186 = sld [smem:[#allocation7]]
    %p187 = scmp.lt.s32.totalorder 0, %s186
    // Predicated region
    $region22: #{_launch.1} parent=1 // pred_check
      %p188 = pneg %p187
    $region23: #{_launch.1} parent=1 // pred_check_branch
      %190 = sbr.rel (%p188) target = $region25
    $region24: #{_launch.1} parent=1 // pred_region
      %s191 = smul.u32 0, 8
      %v192 = vlaneseq
      %v193 = vshrl.u32 %v192, 7
      %v194 = vstv %s191
      %v195 = vadd.s32 %v194, %v193
      %v196 = vld [vmem:[%s168] sm:$0x1]
      %v197 = vlaneseq
      %v198 = vshrl.u32 %v197, 7
      %v199 = vsub.s32 0, %v198
      %v200 = vrot.slane %v196, %v199
      %vm201 = vcmp.eq.s32.totalorder %v195, %v200
      %v202 = vld [vmem:[%s149] sm:$0x1]
      %v204 = vlaneseq
      %v205 = vshrl.u32 %v204, 7
      %v206 = vsub.s32 0, %v205
      %v207 = vrot.slane %v202, %v206
      %v209 = vsel %vm201, %v207, -1e+30
      %210 = vmax.xlane.f32.xlu0 %v209
      %v211 = vpop.xlane.xlu0 %210
      %v212 = vld [vmem:[#allocation2] sm:$0xff]
      %v213 = vmax.f32 %v212, %v211
      %v214 = vsub.f32 %v212, %v213
      %v215 = vmul.f32 %v214, 1.442695
      %v216 = vpow.pop %v215
      %218 = vset.pattern.permute.xlu0 0
      %219 = vperm.xlu0 %218, %v213
      %v220 = vpop.permute.xlu0 %219
      %v222 = vsel %vm201, %v220, -1e+30
      %v223 = vrot.slane %v222, 4
      %v224 = vmax.f32 %v222, %v223
      %v225 = vrot.slane %v224, 2
      %v226 = vmax.f32 %v224, %v225
      %v227 = vrot.slane %v226, 1
      %v228 = vmax.f32 %v226, %v227
      %v229 = vsub.f32 %v202, %v228
      %v230 = vmin.f32 %v229, 0.0
      %v231 = vmul.f32 %v230, 1.442695
      %v232 = vpow.pop %v231
      %v234 = vlaneseq
      %v235 = vshrl.u32 %v234, 7
      %v236 = vsub.s32 0, %v235
      %v237 = vrot.slane %v232, %v236
      %v239 = vsel %vm201, %v237, 0.0
      %v240 = vld [vmem:[#allocation3] sm:$0xff]
      %v241 = vmul.f32 %v216, %v240
      %242 = vadd.xlane.f32.xlu0 %v239
      %v243 = vpop.xlane.xlu0 %242
      %v244 = vadd.f32 %v241, %v243
      %vm245 = vcmask 7168
      %246 = vst.msk [vmem:[#allocation3] sm:$0xff] %vm245, %v244
      %v247 = vld [vmem:[#allocation4] sm:$0xff]
      %249 = vset.pattern.permute.xlu0 0
      %250 = vperm.xlu0 %249, %v216
      %v251 = vpop.permute.xlu0 %250
      %v253 = vmul.f32 %v251, %v247
      %v254 = vpack.c.bf16 %v239, %v239
      %v255 = vld [vmem:[%s129] sm:$0xf]
      %v256 = vld [vmem:[%s129 + $0x4] sm:$0xf]
      %v257 = vld [vmem:[%s129 + $0x8] sm:$0xf]
      %v258 = vld [vmem:[%s129 + $0xc] sm:$0xf]
      %v259 = vld [vmem:[%s129 + $0x10] sm:$0xf]
      %v260 = vld [vmem:[%s129 + $0x14] sm:$0xf]
      %v261 = vld [vmem:[%s129 + $0x18] sm:$0xf]
      %v262 = vld [vmem:[%s129 + $0x1c] sm:$0xf]
      %v263 = vld [vmem:[%s129 + $0x20] sm:$0xf]
      %v264 = vld [vmem:[%s129 + $0x24] sm:$0xf]
      %v265 = vld [vmem:[%s129 + $0x28] sm:$0xf]
      %v266 = vld [vmem:[%s129 + $0x2c] sm:$0xf]
      %v267 = vld [vmem:[%s129 + $0x30] sm:$0xf]
      %v268 = vld [vmem:[%s129 + $0x34] sm:$0xf]
      %v269 = vld [vmem:[%s129 + $0x38] sm:$0xf]
      %v270 = vld [vmem:[%s129 + $0x3c] sm:$0xf]
      %v287 = vunpack.c.l.b16 %v255
      %v288 = vunpack.c.l.b16 %v256
      %v289 = vunpack.c.l.b16 %v257
      %v290 = vunpack.c.l.b16 %v258
      %v291 = vunpack.c.l.b16 %v259
      %v292 = vunpack.c.l.b16 %v260
      %v293 = vunpack.c.l.b16 %v261
      %v294 = vunpack.c.l.b16 %v262
      %v295 = vunpack.c.l.b16 %v263
      %v296 = vunpack.c.l.b16 %v264
      %v297 = vunpack.c.l.b16 %v265
      %v298 = vunpack.c.l.b16 %v266
      %v299 = vunpack.c.l.b16 %v267
      %v300 = vunpack.c.l.b16 %v268
      %v301 = vunpack.c.l.b16 %v269
      %v302 = vunpack.c.l.b16 %v270
      %v303 = vpack.c.b16 %v288, %v287
      %v304 = vpack.c.b16 %v290, %v289
      %v305 = vpack.c.b16 %v292, %v291
      %v306 = vpack.c.b16 %v294, %v293
      %v307 = vpack.c.b16 %v296, %v295
      %v308 = vpack.c.b16 %v298, %v297
      %v309 = vpack.c.b16 %v300, %v299
      %v310 = vpack.c.b16 %v302, %v301
      %319 = vmatprep.subr.bf16.mxu0 0
      %320 = vmatpush1.bf16.msra.mxu0 %v303
      %321 = vmatprep.subr.bf16.mxu0 0
      %322 = vmatpush1.bf16.msra.mxu0 %v304
      %323 = vmatprep.subr.bf16.mxu0 0
      %324 = vmatpush1.bf16.msra.mxu0 %v305
      %325 = vmatprep.subr.bf16.mxu0 0
      %326 = vmatpush1.bf16.msra.mxu0 %v306
      %327 = vmatprep.subr.bf16.mxu0 0
      %328 = vmatpush1.bf16.msra.mxu0 %v307
      %329 = vmatprep.subr.bf16.mxu0 0
      %330 = vmatpush1.bf16.msra.mxu0 %v308
      %331 = vmatprep.subr.bf16.mxu0 0
      %332 = vmatpush1.bf16.msra.mxu0 %v309
      %333 = vmatprep.subr.bf16.mxu0 0
      %334 = vmatpush1.bf16.msra.mxu0 %v310
      %335 = vmatprep.subr.bf16.mxu0 0
      %336 = vmatpush1.bf16.msra.mxu0 0
      %337 = vmatprep.subr.bf16.mxu0 0
      %338 = vmatpush1.bf16.msra.mxu0 0
      %339 = vmatprep.subr.bf16.mxu0 0
      %340 = vmatpush1.bf16.msra.mxu0 0
      %341 = vmatprep.subr.bf16.mxu0 0
      %342 = vmatpush1.bf16.msra.mxu0 0
      %343 = vmatprep.subr.bf16.mxu0 0
      %344 = vmatpush1.bf16.msra.mxu0 0
      %345 = vmatprep.subr.bf16.mxu0 0
      %346 = vmatpush1.bf16.msra.mxu0 0
      %347 = vmatprep.subr.bf16.mxu0 0
      %348 = vmatpush1.bf16.msra.mxu0 0
      %349 = vmatprep.subr.bf16.mxu0 0
      %350 = vmatpush1.bf16.msra.mxu0 0
      %351 = vmatprep.mubr.bf16.mxu0 0
      %352 = vmatmul.mubr.bf16.gmra.mrb[0].mxu0 %v254
      %v353 = vpop.f32.mrb[0].mxu0
      %v354 = vadd.f32 0.0, %v353
      %v355 = vpop.f32.mrb[0].mxu0
      %v356 = vpop.f32.mrb[0].mxu0
      %v357 = vpop.f32.mrb[0].mxu0
      %358 = vdwg.mxu0
      %v359 = vadd.f32 %v253, %v354
      %360 = vst [vmem:[#allocation4] sm:$0xff] %v359
      %361 = vst.msk [vmem:[#allocation2] sm:$0xff] %vm245, %v213
    $region25: #{_launch.1} parent=1 // pred_fallthru
      _
    // Predicated region
    $region26: #{_launch.1} parent=1 // pred_check
      %p362 = pneg %p178
    $region27: #{_launch.1} parent=1 // pred_check_branch
      %364 = sbr.rel (%p362) target = $region29
    $region28: #{_launch.1} parent=1 // pred_region
      %v365 = vld [vmem:[#allocation3] sm:$0xff]
      %vm366 = vcmp.gt.f32.partialorder %v365, 0.0
      %v367 = vsel %vm366, %v365, 1.0
      %v368 = vrcp.pop %v367
      %v369 = vld [vmem:[#allocation4] sm:$0xff]
      %371 = vset.pattern.permute.xlu0 0
      %372 = vperm.xlu0 %371, %v368
      %v373 = vpop.permute.xlu0 %372
      %v375 = vmul.f32 %v369, %v373
      %v376 = vsel %vm366, 1, 0
      %377 = vset.pattern.permute.xlu0 0
      %378 = vperm.xlu0 %377, %v376
      %v379 = vpop.permute.xlu0 %378
      %vm380 = vcmp.eq.s32.totalorder %v379, 1
      %v381 = vsel %vm380, %v375, 0.0
      %v382 = vld [vmem:[%s5] sm:$0xff]
      %v383 = vld [vmem:[%s5 + $0x8] sm:$0xff]
      %v384 = vld [vmem:[%s5 + $0x10] sm:$0xff]
      %v385 = vld [vmem:[%s5 + $0x18] sm:$0xff]
      %v386 = vld [vmem:[%s5 + $0x20] sm:$0xff]
      %v387 = vld [vmem:[%s5 + $0x28] sm:$0xff]
      %v388 = vld [vmem:[%s5 + $0x30] sm:$0xff]
      %v389 = vld [vmem:[%s5 + $0x38] sm:$0xff]
      %v390 = vld [vmem:[%s5 + $0x40] sm:$0xff]
      %v391 = vld [vmem:[%s5 + $0x48] sm:$0xff]
      %v392 = vld [vmem:[%s5 + $0x50] sm:$0xff]
      %v393 = vld [vmem:[%s5 + $0x58] sm:$0xff]
      %v394 = vld [vmem:[%s5 + $0x60] sm:$0xff]
      %v395 = vld [vmem:[%s5 + $0x68] sm:$0xff]
      %v396 = vld [vmem:[%s5 + $0x70] sm:$0xff]
      %v397 = vld [vmem:[%s5 + $0x78] sm:$0xff]
      %398 = vmatprep.subr.mxu0 0.0
      %399 = vmatpush1.msra.mxu0 %v382
      %400 = vmatprep.subr.mxu0 0.0
      %401 = vmatpush1.msra.mxu0 %v383
      %402 = vmatprep.subr.mxu0 0.0
      %403 = vmatpush1.msra.mxu0 %v384
      %404 = vmatprep.subr.mxu0 0.0
      %405 = vmatpush1.msra.mxu0 %v385
      %406 = vmatprep.subr.mxu0 0.0
      %407 = vmatpush1.msra.mxu0 %v386
      %408 = vmatprep.subr.mxu0 0.0
      %409 = vmatpush1.msra.mxu0 %v387
      %410 = vmatprep.subr.mxu0 0.0
      %411 = vmatpush1.msra.mxu0 %v388
      %412 = vmatprep.subr.mxu0 0.0
      %413 = vmatpush1.msra.mxu0 %v389
      %414 = vmatprep.subr.mxu0 0.0
      %415 = vmatpush1.msra.mxu0 %v390
      %416 = vmatprep.subr.mxu0 0.0
      %417 = vmatpush1.msra.mxu0 %v391
      %418 = vmatprep.subr.mxu0 0.0
      %419 = vmatpush1.msra.mxu0 %v392
      %420 = vmatprep.subr.mxu0 0.0
      %421 = vmatpush1.msra.mxu0 %v393
      %422 = vmatprep.subr.mxu0 0.0
      %423 = vmatpush1.msra.mxu0 %v394
      %424 = vmatprep.subr.mxu0 0.0
      %425 = vmatpush1.msra.mxu0 %v395
      %426 = vmatprep.subr.mxu0 0.0
      %427 = vmatpush1.msra.mxu0 %v396
      %428 = vmatprep.subr.mxu0 0.0
      %429 = vmatpush1.msra.mxu0 %v397
      %430 = vmatprep.subr.mxu0 0.0
      %431 = vmatpush1.msra.mxu0 0.0
      %432 = vmatprep.subr.mxu0 0.0
      %433 = vmatpush1.msra.mxu0 0.0
      %434 = vmatprep.subr.mxu0 0.0
      %435 = vmatpush1.msra.mxu0 0.0
      %436 = vmatprep.subr.mxu0 0.0
      %437 = vmatpush1.msra.mxu0 0.0
      %438 = vmatprep.subr.mxu0 0.0
      %439 = vmatpush1.msra.mxu0 0.0
      %440 = vmatprep.subr.mxu0 0.0
      %441 = vmatpush1.msra.mxu0 0.0
      %442 = vmatprep.subr.mxu0 0.0
      %443 = vmatpush1.msra.mxu0 0.0
      %444 = vmatprep.subr.mxu0 0.0
      %445 = vmatpush1.msra.mxu0 0.0
      %446 = vmatprep.subr.mxu0 0.0
      %447 = vmatpush1.msra.mxu0 0.0
      %448 = vmatprep.subr.mxu0 0.0
      %449 = vmatpush1.msra.mxu0 0.0
      %450 = vmatprep.subr.mxu0 0.0
      %451 = vmatpush1.msra.mxu0 0.0
      %452 = vmatprep.subr.mxu0 0.0
      %453 = vmatpush1.msra.mxu0 0.0
      %454 = vmatprep.subr.mxu0 0.0
      %455 = vmatpush1.msra.mxu0 0.0
      %456 = vmatprep.subr.mxu0 0.0
      %457 = vmatpush1.msra.mxu0 0.0
      %458 = vmatprep.subr.mxu0 0.0
      %459 = vmatpush1.msra.mxu0 0.0
      %460 = vmatprep.subr.mxu0 0.0
      %461 = vmatpush1.msra.mxu0 0.0
      %462 = vmatprep.mubr.f32.mxu0 0.0
      %463 = vmatmul.mubr.f32.gmra.mrb[0].mxu0 %v381
      %v464 = vpop.f32.mrb[0].mxu0
      %v465 = vadd.f32 0.0, %v464
      %v466 = vpop.f32.mrb[0].mxu0
      %467 = vdwg.mxu0
      %v468 = vtanh.pop %v465
      %469 = vst [vmem:[#allocation8] sm:$0xff] %v468
    $region29: #{_launch.1} parent=1 // pred_fallthru
      _
    // Predicated region
    $region30: #{_launch.1} parent=1 // pred_check
      _
    $region31: #{_launch.1} parent=1 // pred_check_branch
      %471 = sbr.rel (0) target = $region33
    $region32: #{_launch.1} parent=1 // pred_region
      %s473 = ssub.s32 128, 128
      %474 = vsyncadd [#allocation9], %s473
      %s476 = sshll.u32 [#allocation8], 4
      %s477 = int_to_ptr.vmem [resolvable:$true] %s476
      %479 = dma.vmem_to_hbm [thread:$0]  %s477, 128, %s6, [#allocation9]
    $region33: #{_launch.1} parent=1 // pred_fallthru
      _
    // Predicated region
    $region34: #{_launch.1} parent=1 // pred_check
      _
    $region35: #{_launch.1} parent=1 // pred_check_branch
      %481 = sbr.rel (0) target = $region37
    $region36: #{_launch.1} parent=1 // pred_region
      %482 = dma.done [#allocation9], 128
    $region37: #{_launch.1} parent=1 // pred_fallthru
      _
    %483 = vsyncpa [#allocation9], 1

</llo_original>
